<compile_context>
chip_gen: v7x
topology: tpu7x:2x2x1
jax: 0.10.0
libtpu: 0.0.40
codegen_flags: <defaults>
</compile_context>

<pallas_src>
import functools

import jax
import jax.numpy as jnp
from jax import lax
from jax.experimental import pallas as pl
from jax.experimental.pallas import tpu as pltpu


def _round_up(x: int, m: int) -> int:
    return ((x + m - 1) // m) * m


def _linear_unit_kernel(x_ref, w_ref, b_ref, o_ref):
    # x_ref: (TM, F_in)  w_ref: (F_out, F_in)  b_ref: (1, F_out)  o_ref: (TM, F_out)
    # Contract x's feature dim against w's feature dim (PyTorch layout) on the
    # MXU; accumulate in f32.
    y = lax.dot_general(
        x_ref[...],
        w_ref[...],
        dimension_numbers=(((1,), (1,)), ((), ())),
        preferred_element_type=jnp.float32,
    )
    y = y + b_ref[...]                       # bias broadcast over batch rows (f32)
    # LeakyReLU(negative_slope=0.2) in f32, single cast at the store.
    o_ref[...] = jnp.where(y >= 0, y, 0.2 * y).astype(o_ref.dtype)


def _pad2d(a, rows, cols):
    r, c = a.shape
    if r == rows and c == cols:
        return a
    return jnp.pad(a, ((0, rows - r), (0, cols - c)))


def linear_unit(x, weight, bias, *, tm: int = 512):
    """LeakyReLU_{0.2}(x @ weight.T + bias), matching nn.Linear semantics.

    x:      (..., in_features)            -- arbitrary leading dims
    weight: (out_features, in_features)   -- PyTorch nn.Linear layout
    bias:   (out_features,)
    tm:     batch tile rows. With double-buffered x/out tiles plus a resident
            W block, VMEM use is ~4*(2*tm*F_in + 2*tm*F_out + F_out*F_in)
            bytes; tm=512 stays well under every chip's scoped-VMEM default
            for typical MLP widths and is near the HBM-roofline sweet spot.
    """
    orig_lead = x.shape[:-1]
    F_in = x.shape[-1]
    x2 = x.reshape(-1, F_in)
    B = x2.shape[0]
    F_out = weight.shape[0]

    # Lane-dense padding: features -> multiples of 128, batch -> multiple of tm
    # (tm itself shrunk for small batches so the block never exceeds the array).
    f_in_p = _round_up(F_in, 128)
    f_out_p = _round_up(F_out, 128)
    tm = max(8, min(tm, _round_up(B, 8)))
    b_p = _round_up(B, tm)

    x_p = _pad2d(x2, b_p, f_in_p)                        # zero pad: no effect on matmul
    w_p = _pad2d(weight, f_out_p, f_in_p)
    bias_p = _pad2d(bias.reshape(1, F_out), 1, f_out_p)  # keep 2-D for TPU layout

    grid = (b_p // tm,)

    out = pl.pallas_call(
        _linear_unit_kernel,
        out_shape=jax.ShapeDtypeStruct((b_p, f_out_p), x.dtype),
        grid_spec=pltpu.PrefetchScalarGridSpec(
            num_scalar_prefetch=0,
            grid=grid,
            in_specs=[
                # x: one batch tile per grid step (pipelined HBM<->VMEM)
                pl.BlockSpec((tm, f_in_p), lambda i: (i, 0)),
                # weight & bias: same block every step -> VMEM resident
                pl.BlockSpec((f_out_p, f_in_p), lambda i: (0, 0)),
                pl.BlockSpec((1, f_out_p), lambda i: (0, 0)),
            ],
            out_specs=pl.BlockSpec((tm, f_out_p), lambda i: (i, 0)),
        ),
        compiler_params=pltpu.CompilerParams(
            # Batch tiles are independent: lets Mosaic shard across the two
            # TensorCores on v7x; no-op on single-TC v5e/v6e.
            dimension_semantics=("parallel",),
        ),
        cost_estimate=pl.CostEstimate(
            flops=2 * b_p * f_in_p * f_out_p,
            transcendentals=0,
            bytes_accessed=4 * (b_p * f_in_p + f_out_p * f_in_p + b_p * f_out_p),
        ),
    )(x_p, w_p, bias_p)

    # Drop any batch / feature padding, restore leading dims.
    out = out[:B, :F_out]
    return out.reshape(*orig_lead, F_out)


# TODO(synk): at toy shapes this layer is launch-overhead bound; in the real
# model the win is fusing several stacked LinearUnits into one kernel with all
# weights VMEM-resident rather than calling this kernel per layer.


def _ref(x, w, b):
    y = x @ w.T + b
    return jnp.where(y >= 0, y, 0.2 * y)


if __name__ == "__main__":
    key = jax.random.PRNGKey(0)
    kx, kw, kb = jax.random.split(key, 3)

    # Case 1: lane-aligned shapes (exercises multi-tile grid pipelining).
    B, F_IN, F_OUT = 256, 128, 256
    bound = 1.0 / (F_IN ** 0.5)
    weight = jax.random.uniform(kw, (F_OUT, F_IN), jnp.float32, -bound, bound)
    bias = jax.random.uniform(kb, (F_OUT,), jnp.float32, -bound, bound)
    x = jax.random.normal(kx, (B, F_IN), jnp.float32)

    fn = jax.jit(functools.partial(linear_unit, tm=128))
    out = fn(x, weight, bias)
    jax.block_until_ready(out)
    assert out.shape == (B, F_OUT)
    assert jnp.allclose(out, _ref(x, weight, bias), atol=1e-5, rtol=1e-5)

    # Case 2: small, non-aligned shapes (exercises the padding path).
    B2, F_IN2, F_OUT2 = 6, 32, 48
    bound2 = 1.0 / (F_IN2 ** 0.5)
    w2 = jax.random.uniform(kw, (F_OUT2, F_IN2), jnp.float32, -bound2, bound2)
    b2 = jax.random.uniform(kb, (F_OUT2,), jnp.float32, -bound2, bound2)
    x2 = jax.random.normal(kx, (B2, F_IN2), jnp.float32)
    out2 = linear_unit(x2, w2, b2)
    jax.block_until_ready(out2)
    assert out2.shape == (B2, F_OUT2)
    assert jnp.allclose(out2, _ref(x2, w2, b2), atol=1e-5, rtol=1e-5)

    # Case 3: 3-D input, like calling LinearUnit on a (batch, time, feat) tensor.
    B3, T3, F_IN3, F_OUT3 = 2, 8, 32, 64
    bound3 = 1.0 / (F_IN3 ** 0.5)
    w3 = jax.random.uniform(kw, (F_OUT3, F_IN3), jnp.float32, -bound3, bound3)
    b3 = jax.random.uniform(kb, (F_OUT3,), jnp.float32, -bound3, bound3)
    x3 = jax.random.normal(kx, (B3, T3, F_IN3), jnp.float32)
    out3 = linear_unit(x3, w3, b3)
    jax.block_until_ready(out3)
    assert out3.shape == (B3, T3, F_OUT3)
    assert jnp.allclose(
        out3, _ref(x3.reshape(-1, F_IN3), w3, b3).reshape(B3, T3, F_OUT3),
        atol=1e-5, rtol=1e-5)

    print("KERNEL_OK")
</pallas_src>

<mosaic_0001>
module attributes {stable_mosaic.version = 11 : i64} {
  func.func @_linear_unit_kernel(%arg0: i32, %arg1: memref<128x128xf32, #tpu.memory_space<vmem>>, %arg2: memref<256x128xf32, #tpu.memory_space<vmem>>, %arg3: memref<1x256xf32, #tpu.memory_space<vmem>>, %arg4: memref<128x256xf32, #tpu.memory_space<vmem>>) attributes {dimension_semantics = [#tpu.dimension_semantics<parallel>], iteration_bounds = array<i64: 2>, scalar_prefetch = 0 : i64, scratch_operands = 0 : i64, tpu.core_type = #tpu.core_type<tc>, window_params = [{transform_indices = @transform_0, window_bounds = array<i64: 128, 128>}, {pipeline_mode = #tpu.pipeline_mode<synchronous>, transform_indices = @transform_1, window_bounds = array<i64: 256, 128>}, {pipeline_mode = #tpu.pipeline_mode<synchronous>, transform_indices = @transform_2, window_bounds = array<i64: 1, 256>}, {transform_indices = @transform_3, window_bounds = array<i64: 128, 256>}]} {
    %c0 = arith.constant 0 : index
    %c0_0 = arith.constant 0 : index
    %0 = vector.load %arg1[%c0, %c0_0] : memref<128x128xf32, #tpu.memory_space<vmem>>, vector<128x128xf32>
    %c0_1 = arith.constant 0 : index
    %c0_2 = arith.constant 0 : index
    %1 = vector.load %arg2[%c0_1, %c0_2] : memref<256x128xf32, #tpu.memory_space<vmem>>, vector<256x128xf32>
    %cst = arith.constant dense<0.000000e+00> : vector<128x256xf32>
    %2 = tpu.matmul %0, %1, %cst {dimension_numbers = #tpu.dot_dimension_numbers<[1], [1], [0], [0], [0, 0, 1, 0], [], []>} : vector<128x128xf32>, vector<256x128xf32>, vector<128x256xf32> -> vector<128x256xf32>
    %c0_3 = arith.constant 0 : index
    %c0_4 = arith.constant 0 : index
    %3 = vector.load %arg3[%c0_3, %c0_4] : memref<1x256xf32, #tpu.memory_space<vmem>>, vector<1x256xf32>
    %4 = vector.broadcast %3 : vector<1x256xf32> to vector<128x256xf32>
    %5 = arith.addf %2, %4 : vector<128x256xf32>
    %cst_5 = arith.constant 0.000000e+00 : f32
    %6 = vector.broadcast %cst_5 : f32 to vector<128x256xf32>
    %7 = arith.cmpf oge, %5, %6 : vector<128x256xf32>
    %cst_6 = arith.constant 2.000000e-01 : f32
    %8 = vector.broadcast %cst_6 : f32 to vector<128x256xf32>
    %9 = arith.mulf %8, %5 : vector<128x256xf32>
    %10 = arith.select %7, %5, %9 : vector<128x256xi1>, vector<128x256xf32>
    %c0_7 = arith.constant 0 : index
    %c0_8 = arith.constant 0 : index
    %11 = vector.load %arg4[%c0_7, %c0_8] : memref<128x256xf32, #tpu.memory_space<vmem>>, vector<128x256xf32>
    tpu.vector_store %arg4[%c0_7, %c0_8], %10 {strides = array<i32>} : memref<128x256xf32, #tpu.memory_space<vmem>>, vector<128x256xf32>,
    return
  }
  func.func @transform_0(%arg0: i32) -> (i32, i32) {
    %c0_i32 = arith.constant 0 : i32
    %c0_i32_0 = arith.constant 0 : i32
    return %arg0, %c0_i32 : i32, i32
  }
  func.func @transform_1(%arg0: i32) -> (i32, i32) {
    %c0_i32 = arith.constant 0 : i32
    %c0_i32_0 = arith.constant 0 : i32
    %c0_i32_1 = arith.constant 0 : i32
    return %c0_i32, %c0_i32_0 : i32, i32
  }
  func.func @transform_2(%arg0: i32) -> (i32, i32) {
    %c0_i32 = arith.constant 0 : i32
    %c0_i32_0 = arith.constant 0 : i32
    %c0_i32_1 = arith.constant 0 : i32
    return %c0_i32, %c0_i32_0 : i32, i32
  }
  func.func @transform_3(%arg0: i32) -> (i32, i32) {
    %c0_i32 = arith.constant 0 : i32
    %c0_i32_0 = arith.constant 0 : i32
    return %arg0, %c0_i32 : i32, i32
  }
}

</mosaic_0001>

<llo_original>
// kernel: linear_unit.1
$region0: #{linear_unit.1}
  #allocation0 [shape = 'u32[]', space=smem, size = 0x4, offset = 0x4, fixed_abs, tag = 'smem constant byte address 0x4 - core index']
  #allocation1 [shape = 'u32[144,128]{1,0:T(1,128)}', space=vmem, size = 0x12000, scoped, tag = 'internal scratch']
  %s0 = inlined_call_operand.hbm [shape: f32[256,128], index: 0, kind: input, shape index: {}]
  %s1 = inlined_call_operand.hbm [shape: f32[256,128], index: 1, kind: input, shape index: {}]
  %s2 = inlined_call_operand.vmem [shape: f32[1,256], index: 2, kind: input, shape index: {}]
  %s3 = inlined_call_operand.hbm [shape: f32[256,256], index: 3, kind: output, shape index: {}]
  %s4 = sld [smem:[#allocation0]]
  $region53: #{linear_unit.1} parent=0
    _
  %s6 = ssub.s32 1, %s4
  %s7 = scalar_select 0, %s6, %s4
  $region1: #{linear_unit.1} parent=0
    #allocation2 [shape = 'u8[131072]{0}', space=vmem, size = 0x20000, scoped, tag = 'input window, operand 0']
    #allocation3 [shape = 's32[2]{0}', space=sflag, size = 0x8, scoped, tag = 'scoped memory for linear_unit.1']
    #allocation4 [shape = 's32[2]{0}', space=sflag, size = 0x8, scoped, tag = 'scoped memory for linear_unit.1']
    #allocation5 [shape = 'u8[131072]{0}', space=vmem, size = 0x20000, scoped, tag = 'input window, operand 1, single buffered']
    #allocation6 [shape = 's32[1]{0}', space=sflag, size = 0x4, scoped, tag = 'scoped memory for linear_unit.1']
    #allocation7 [shape = 'u8[262144]{0}', space=vmem, size = 0x40000, scoped, tag = 'output window, operand 0']
    %8 = vsyncpa [#allocation3], 0
    %s9 = scalar_lea.sflag [#allocation3], 1
    %10 = vsyncpa %s9, 0
    %11 = vsyncpa [#allocation6], 0
    %12 = vsyncpa [#allocation4], 0
    %s13 = scalar_lea.sflag [#allocation4], 1
    %14 = vsyncpa %s13, 0
    loop: start=0, step=1, limit=4
    $region2: #{linear_unit.1} parent=1 // loop_pre_header
      _
    $region3: #{linear_unit.1} parent=1 // loop_header
      %s16 = sphi 0, %s20
      %p17 = scmp.ge.s32.totalorder %s16, 4
      %s26 = sphi 0, %s28
      %s29 = sphi 0, %s26
      %s30 = sphi 0, %s29
      %s46 = sphi 0, %s30
      %s50 = sphi 0, %s50
      %s52 = sphi 0, %s50
      %s53 = sphi 0, %s52
      %s67 = sphi 0, %s53
      %s71 = sphi 0, %s71
      %s73 = sphi 0, %s71
      %s74 = sphi 0, %s73
      %s88 = sphi 0, %s74
      %s94 = sphi 0, %s96
      %s97 = sphi 0, %s94
      %s98 = sphi 0, %s97
      %s114 = sphi 0, %s98
    $region4: #{linear_unit.1} parent=1 // loop_header_branch
      %19 = sbr.rel (%p17) target = $region8
    $region5: #{linear_unit.1} parent=1 // loop_body
      %s21 = ssub.s32 %s16, 1
      %s22 = ssub.s32 %s16, 2
      %s23 = sadd.s32 %s16, 1
      %s24 = ssub.s32 %s16, %s23
      %p25 = scmp.eq.s32.totalorder %s24, 0
      %s27 = sadd.s32 %s26, 1
      %s28 = scalar_select %p25, %s26, %s27
      %p31 = pneg %p25
      %p32 = scmp.eq.s32.totalorder %s16, 1
      %p33 = por %p31, %p32
      %p34 = scmp.ne.s32.totalorder %s26, %s29
      %p35 = scmp.eq.s32.totalorder %s16, 0
      %p36 = por %p34, %p35
      %p37 = scmp.ne.s32.totalorder %s26, %s29
      %p38 = scmp.eq.s32.totalorder %s21, 1
      %p39 = por %p37, %p38
      %p40 = scmp.ne.s32.totalorder %s29, %s30
      %p41 = scmp.eq.s32.totalorder %s21, 0
      %p42 = por %p40, %p41
      %p43 = scmp.ne.s32.totalorder %s29, %s30
      %p44 = scmp.eq.s32.totalorder %s22, 1
      %p45 = por %p43, %p44
      %p47 = scmp.ne.s32.totalorder %s30, %s46
      %p48 = scmp.eq.s32.totalorder %s22, 0
      %p49 = por %p47, %p48
      %s51 = sadd.s32 %s50, 1
      %p54 = scmp.eq.s32.totalorder %s16, 1
      %p55 = scmp.ne.s32.totalorder %s50, %s52
      %p56 = scmp.eq.s32.totalorder %s16, 0
      %p57 = por %p55, %p56
      %p58 = scmp.ne.s32.totalorder %s50, %s52
      %p59 = scmp.eq.s32.totalorder %s21, 1
      %p60 = por %p58, %p59
      %p61 = scmp.ne.s32.totalorder %s52, %s53
      %p62 = scmp.eq.s32.totalorder %s21, 0
      %p63 = por %p61, %p62
      %p64 = scmp.ne.s32.totalorder %s52, %s53
      %p65 = scmp.eq.s32.totalorder %s22, 1
      %p66 = por %p64, %p65
      %p68 = scmp.ne.s32.totalorder %s53, %s67
      %p69 = scmp.eq.s32.totalorder %s22, 0
      %p70 = por %p68, %p69
      %s72 = sadd.s32 %s71, 1
      %p75 = scmp.eq.s32.totalorder %s16, 1
      %p76 = scmp.ne.s32.totalorder %s71, %s73
      %p77 = scmp.eq.s32.totalorder %s16, 0
      %p78 = por %p76, %p77
      %p79 = scmp.ne.s32.totalorder %s71, %s73
      %p80 = scmp.eq.s32.totalorder %s21, 1
      %p81 = por %p79, %p80
      %p82 = scmp.ne.s32.totalorder %s73, %s74
      %p83 = scmp.eq.s32.totalorder %s21, 0
      %p84 = por %p82, %p83
      %p85 = scmp.ne.s32.totalorder %s73, %s74
      %p86 = scmp.eq.s32.totalorder %s22, 1
      %p87 = por %p85, %p86
      %p89 = scmp.ne.s32.totalorder %s74, %s88
      %p90 = scmp.eq.s32.totalorder %s22, 0
      %p91 = por %p89, %p90
      %s92 = ssub.s32 %s16, %s23
      %p93 = scmp.eq.s32.totalorder %s92, 0
      %s95 = sadd.s32 %s94, 1
      %s96 = scalar_select %p93, %s94, %s95
      %p99 = pneg %p93
      %p100 = scmp.eq.s32.totalorder %s16, 1
      %p101 = por %p99, %p100
      %p102 = scmp.ne.s32.totalorder %s94, %s97
      %p103 = scmp.eq.s32.totalorder %s16, 0
      %p104 = por %p102, %p103
      %p105 = scmp.ne.s32.totalorder %s94, %s97
      %p106 = scmp.eq.s32.totalorder %s21, 1
      %p107 = por %p105, %p106
      %p108 = scmp.ne.s32.totalorder %s97, %s98
      %p109 = scmp.eq.s32.totalorder %s21, 0
      %p110 = por %p108, %p109
      %p111 = scmp.ne.s32.totalorder %s97, %s98
      %p112 = scmp.eq.s32.totalorder %s22, 1
      %p113 = por %p111, %p112
      %p115 = scmp.ne.s32.totalorder %s98, %s114
      %p116 = scmp.eq.s32.totalorder %s22, 0
      %p117 = por %p115, %p116
      %p118 = scmp.le.s32.totalorder 1, %s16
      %p119 = scmp.lt.s32.totalorder %s16, 3
      %p120 = pnand %p118, %p119
      %p121 = pneg %p120
      // Predicated region
      $region9: #{linear_unit.1} parent=5 // pred_check
        _
      $region10: #{linear_unit.1} parent=5 // pred_check_branch
        %123 = sbr.rel (%p120) target = $region12
      $region11: #{linear_unit.1} parent=5 // pred_region
        %s124 = ssub.s32 %s16, 1
        // Predicated region
        $region13: #{linear_unit.1} parent=11 // pred_check
          %p125 = pneg %p63
        $region14: #{linear_unit.1} parent=11 // pred_check_branch
          %127 = sbr.rel (%p125) target = $region16
        $region15: #{linear_unit.1} parent=11 // pred_region
          %s129 = ssub.s32 4096, 4096
          %130 = vsyncadd [#allocation6], %s129
          %s131 = sshll.u32 [#allocation5], 4
          %s132 = int_to_ptr.vmem [resolvable:$true] %s131
          %137 = dma.hbm_to_vmem [thread:$0]  %s1, 4096, %s132, [#allocation6], 128, 128, 8
        $region16: #{linear_unit.1} parent=11 // pred_fallthru
          _
        // Predicated region
        $region17: #{linear_unit.1} parent=11 // pred_check
          %p138 = pneg %p84
        $region18: #{linear_unit.1} parent=11 // pred_check_branch
          %140 = sbr.rel (%p138) target = $region20
        $region19: #{linear_unit.1} parent=11 // pred_region
          _
        $region20: #{linear_unit.1} parent=11 // pred_fallthru
          _
      $region12: #{linear_unit.1} parent=5 // pred_fallthru
        _
      %p141 = scmp.lt.s32.totalorder %s16, 2
      // Predicated region
      $region21: #{linear_unit.1} parent=5 // pred_check
        %p142 = pneg %p141
      $region22: #{linear_unit.1} parent=5 // pred_check_branch
        %144 = sbr.rel (%p142) target = $region24
      $region23: #{linear_unit.1} parent=5 // pred_region
        // Predicated region
        $region25: #{linear_unit.1} parent=23 // pred_check
          %p145 = pneg %p36
        $region26: #{linear_unit.1} parent=23 // pred_check_branch
          %147 = sbr.rel (%p145) target = $region28
        $region27: #{linear_unit.1} parent=23 // pred_region
          %s148 = sand.u32 %s26, 1
          %s149 = scalar_lea.sflag [#allocation3], %s148
          %s150 = sand.u32 %s26, 1
          %s151 = smul.addr %s150, 128
          %s152 = scalar_lea.vmem [#allocation2], %s151
          %s153 = smul.u32 16, %s16
          %s155 = ssub.s32 2048, 2048
          %156 = vsyncadd %s149, %s155
          %s157 = smul.addr %s153, 128
          %s158 = scalar_lea.hbm %s0, %s157
          %s159 = sshll.u32 %s152, 4
          %s160 = int_to_ptr.vmem [resolvable:$true] %s159
          %165 = dma.hbm_to_vmem [thread:$0]  %s158, 2048, %s160, %s149, 128, 128, 8
        $region28: #{linear_unit.1} parent=23 // pred_fallthru
          _
      $region24: #{linear_unit.1} parent=5 // pred_fallthru
        _
      %p166 = scmp.le.s32.totalorder 1, %s16
      %p167 = scmp.lt.s32.totalorder %s16, 3
      %p168 = pnand %p166, %p167
      %p169 = pneg %p168
      // Predicated region
      $region29: #{linear_unit.1} parent=5 // pred_check
        _
      $region30: #{linear_unit.1} parent=5 // pred_check_branch
        %171 = sbr.rel (%p168) target = $region32
      $region31: #{linear_unit.1} parent=5 // pred_region
        %s172 = ssub.s32 %s16, 1
        %s173 = sand.u32 %s29, 1
        %s174 = scalar_lea.sflag [#allocation3], %s173
        %s175 = sand.u32 %s29, 1
        %s176 = smul.addr %s175, 128
        %s177 = scalar_lea.vmem [#allocation2], %s176
        // Predicated region
        $region33: #{linear_unit.1} parent=31 // pred_check
          %p178 = pneg %p42
        $region34: #{linear_unit.1} parent=31 // pred_check_branch
          %180 = sbr.rel (%p178) target = $region36
        $region35: #{linear_unit.1} parent=31 // pred_region
          %181 = dma.done %s174, 2048
        $region36: #{linear_unit.1} parent=31 // pred_fallthru
          _
        // Predicated region
        $region37: #{linear_unit.1} parent=31 // pred_check
          %p182 = pneg %p63
        $region38: #{linear_unit.1} parent=31 // pred_check_branch
          %184 = sbr.rel (%p182) target = $region40
        $region39: #{linear_unit.1} parent=31 // pred_region
          %185 = dma.done [#allocation6], 4096
        $region40: #{linear_unit.1} parent=31 // pred_fallthru
          _
        %s186 = sand.u32 %s29, 1
        %s187 = scalar_lea.sflag [#allocation3], %s186
        %s188 = sand.u32 %s29, 1
        %s189 = smul.addr %s188, 128
        %s190 = scalar_lea.vmem [#allocation2], %s189
        %p191 = pneg %p42
        %p192 = pneg %p39
        %p193 = pneg %p63
        %p194 = pneg %p60
        %p195 = pneg %p84
        %p196 = pneg %p81
        %p197 = pneg %p110
        %p198 = pneg %p107
        %s199 = sand.u32 %s97, 1
        %s200 = scalar_lea.sflag [#allocation4], %s199
        %s201 = sand.u32 %s97, 1
        %s202 = smul.addr %s201, 256
        %s203 = scalar_lea.vmem [#allocation7], %s202
        %s204 = smul.u32 16, %s21
        %s205 = smul.u32 16, %s21
        %v206 = vld [vmem:[%s177] sm:$0xff]
        %v207 = vld [vmem:[%s177 + $0x8] sm:$0xff]
        %v208 = vld [vmem:[%s177 + $0x10] sm:$0xff]
        %v209 = vld [vmem:[%s177 + $0x18] sm:$0xff]
        %v210 = vld [vmem:[%s177 + $0x20] sm:$0xff]
        %v211 = vld [vmem:[%s177 + $0x28] sm:$0xff]
        %v212 = vld [vmem:[%s177 + $0x30] sm:$0xff]
        %v213 = vld [vmem:[%s177 + $0x38] sm:$0xff]
        %v214 = vld [vmem:[%s177 + $0x40] sm:$0xff]
        %v215 = vld [vmem:[%s177 + $0x48] sm:$0xff]
        %v216 = vld [vmem:[%s177 + $0x50] sm:$0xff]
        %v217 = vld [vmem:[%s177 + $0x58] sm:$0xff]
        %v218 = vld [vmem:[%s177 + $0x60] sm:$0xff]
        %v219 = vld [vmem:[%s177 + $0x68] sm:$0xff]
        %v220 = vld [vmem:[%s177 + $0x70] sm:$0xff]
        %v221 = vld [vmem:[%s177 + $0x78] sm:$0xff]
        %v222 = vld [vmem:[#allocation5] sm:$0xff]
        %v223 = vld [vmem:[#allocation5 + $0x8] sm:$0xff]
        %v224 = vld [vmem:[#allocation5 + $0x10] sm:$0xff]
        %v225 = vld [vmem:[#allocation5 + $0x18] sm:$0xff]
        %v226 = vld [vmem:[#allocation5 + $0x20] sm:$0xff]
        %v227 = vld [vmem:[#allocation5 + $0x28] sm:$0xff]
        %v228 = vld [vmem:[#allocation5 + $0x30] sm:$0xff]
        %v229 = vld [vmem:[#allocation5 + $0x38] sm:$0xff]
        %v230 = vld [vmem:[#allocation5 + $0x40] sm:$0xff]
        %v231 = vld [vmem:[#allocation5 + $0x48] sm:$0xff]
        %v232 = vld [vmem:[#allocation5 + $0x50] sm:$0xff]
        %v233 = vld [vmem:[#allocation5 + $0x58] sm:$0xff]
        %v234 = vld [vmem:[#allocation5 + $0x60] sm:$0xff]
        %v235 = vld [vmem:[#allocation5 + $0x68] sm:$0xff]
        %v236 = vld [vmem:[#allocation5 + $0x70] sm:$0xff]
        %v237 = vld [vmem:[#allocation5 + $0x78] sm:$0xff]
        %v238 = vld [vmem:[#allocation5 + $0x80] sm:$0xff]
        %v239 = vld [vmem:[#allocation5 + $0x88] sm:$0xff]
        %v240 = vld [vmem:[#allocation5 + $0x90] sm:$0xff]
        %v241 = vld [vmem:[#allocation5 + $0x98] sm:$0xff]
        %v242 = vld [vmem:[#allocation5 + $0xa0] sm:$0xff]
        %v243 = vld [vmem:[#allocation5 + $0xa8] sm:$0xff]
        %v244 = vld [vmem:[#allocation5 + $0xb0] sm:$0xff]
        %v245 = vld [vmem:[#allocation5 + $0xb8] sm:$0xff]
        %v246 = vld [vmem:[#allocation5 + $0xc0] sm:$0xff]
        %v247 = vld [vmem:[#allocation5 + $0xc8] sm:$0xff]
        %v248 = vld [vmem:[#allocation5 + $0xd0] sm:$0xff]
        %v249 = vld [vmem:[#allocation5 + $0xd8] sm:$0xff]
        %v250 = vld [vmem:[#allocation5 + $0xe0] sm:$0xff]
        %v251 = vld [vmem:[#allocation5 + $0xe8] sm:$0xff]
        %v252 = vld [vmem:[#allocation5 + $0xf0] sm:$0xff]
        %v253 = vld [vmem:[#allocation5 + $0xf8] sm:$0xff]
        %v254 = vld [vmem:[%s2] sm:$0x3]
        %v256 = vlaneseq
        %v257 = vshrl.u32 %v256, 7
        %v258 = vsub.s32 0, %v257
        %v259 = vrot.slane %v254, %v258
        %v260 = vlaneseq
        %v261 = vshrl.u32 %v260, 7
        %v262 = vsub.s32 1, %v261
        %v263 = vrot.slane %v254, %v262
        %266 = vmatprep.subr.mxu0 0.0
        %267 = vmatpush1.xpose.msra.mxu0 %v222
        %268 = vmatprep.subr.mxu0 0.0
        %269 = vmatpush1.xpose.msra.mxu0 %v223
        %270 = vmatprep.subr.mxu0 0.0
        %271 = vmatpush1.xpose.msra.mxu0 %v224
        %272 = vmatprep.subr.mxu0 0.0
        %273 = vmatpush1.xpose.msra.mxu0 %v225
        %274 = vmatprep.subr.mxu0 0.0
        %275 = vmatpush1.xpose.msra.mxu0 %v226
        %276 = vmatprep.subr.mxu0 0.0
        %277 = vmatpush1.xpose.msra.mxu0 %v227
        %278 = vmatprep.subr.mxu0 0.0
        %279 = vmatpush1.xpose.msra.mxu0 %v228
        %280 = vmatprep.subr.mxu0 0.0
        %281 = vmatpush1.xpose.msra.mxu0 %v229
        %282 = vmatprep.subr.mxu0 0.0
        %283 = vmatpush1.xpose.msra.mxu0 %v230
        %284 = vmatprep.subr.mxu0 0.0
        %285 = vmatpush1.xpose.msra.mxu0 %v231
        %286 = vmatprep.subr.mxu0 0.0
        %287 = vmatpush1.xpose.msra.mxu0 %v232
        %288 = vmatprep.subr.mxu0 0.0
        %289 = vmatpush1.xpose.msra.mxu0 %v233
        %290 = vmatprep.subr.mxu0 0.0
        %291 = vmatpush1.xpose.msra.mxu0 %v234
        %292 = vmatprep.subr.mxu0 0.0
        %293 = vmatpush1.xpose.msra.mxu0 %v235
        %294 = vmatprep.subr.mxu0 0.0
        %295 = vmatpush1.xpose.msra.mxu0 %v236
        %296 = vmatprep.subr.mxu0 0.0
        %297 = vmatpush1.xpose.msra.mxu0 %v237
        %298 = vmatprep.subr.mxu0 0.0
        %299 = vmatpush1.xpose.msra.mxu0 %v238
        %300 = vmatprep.subr.mxu0 0.0
        %301 = vmatpush1.xpose.msra.mxu0 %v239
        %302 = vmatprep.subr.mxu0 0.0
        %303 = vmatpush1.xpose.msra.mxu0 %v240
        %304 = vmatprep.subr.mxu0 0.0
        %305 = vmatpush1.xpose.msra.mxu0 %v241
        %306 = vmatprep.subr.mxu0 0.0
        %307 = vmatpush1.xpose.msra.mxu0 %v242
        %308 = vmatprep.subr.mxu0 0.0
        %309 = vmatpush1.xpose.msra.mxu0 %v243
        %310 = vmatprep.subr.mxu0 0.0
        %311 = vmatpush1.xpose.msra.mxu0 %v244
        %312 = vmatprep.subr.mxu0 0.0
        %313 = vmatpush1.xpose.msra.mxu0 %v245
        %314 = vmatprep.subr.mxu0 0.0
        %315 = vmatpush1.xpose.msra.mxu0 %v246
        %316 = vmatprep.subr.mxu0 0.0
        %317 = vmatpush1.xpose.msra.mxu0 %v247
        %318 = vmatprep.subr.mxu0 0.0
        %319 = vmatpush1.xpose.msra.mxu0 %v248
        %320 = vmatprep.subr.mxu0 0.0
        %321 = vmatpush1.xpose.msra.mxu0 %v249
        %322 = vmatprep.subr.mxu0 0.0
        %323 = vmatpush1.xpose.msra.mxu0 %v250
        %324 = vmatprep.subr.mxu0 0.0
        %325 = vmatpush1.xpose.msra.mxu0 %v251
        %326 = vmatprep.subr.mxu0 0.0
        %327 = vmatpush1.xpose.msra.mxu0 %v252
        %328 = vmatprep.subr.mxu0 0.0
        %329 = vmatpush1.xpose.msra.mxu0 %v253
        %330 = vmatprep.mubr.f32.mxu0 0.0
        %331 = vmatmul.mubr.f32.gmra.mrb[0].mxu0 %v206
        %v332 = vpop.f32.mrb[0].mxu0
        %v333 = vadd.f32 %v259, %v332
        %v334 = vpop.f32.mrb[0].mxu0
        %v335 = vadd.f32 %v263, %v334
        %336 = vmatprep.mubr.f32.mxu0 0.0
        %337 = vmatmul.mubr.f32.gmra.mrb[0].mxu0 %v207
        %v338 = vpop.f32.mrb[0].mxu0
        %v339 = vadd.f32 %v259, %v338
        %v340 = vpop.f32.mrb[0].mxu0
        %v341 = vadd.f32 %v263, %v340
        %342 = vmatprep.mubr.f32.mxu0 0.0
        %343 = vmatmul.mubr.f32.gmra.mrb[0].mxu0 %v208
        %v344 = vpop.f32.mrb[0].mxu0
        %v345 = vadd.f32 %v259, %v344
        %v346 = vpop.f32.mrb[0].mxu0
        %v347 = vadd.f32 %v263, %v346
        %348 = vmatprep.mubr.f32.mxu0 0.0
        %349 = vmatmul.mubr.f32.gmra.mrb[0].mxu0 %v209
        %v350 = vpop.f32.mrb[0].mxu0
        %v351 = vadd.f32 %v259, %v350
        %v352 = vpop.f32.mrb[0].mxu0
        %v353 = vadd.f32 %v263, %v352
        %354 = vmatprep.mubr.f32.mxu0 0.0
        %355 = vmatmul.mubr.f32.gmra.mrb[0].mxu0 %v210
        %v356 = vpop.f32.mrb[0].mxu0
        %v357 = vadd.f32 %v259, %v356
        %v358 = vpop.f32.mrb[0].mxu0
        %v359 = vadd.f32 %v263, %v358
        %360 = vmatprep.mubr.f32.mxu0 0.0
        %361 = vmatmul.mubr.f32.gmra.mrb[0].mxu0 %v211
        %v362 = vpop.f32.mrb[0].mxu0
        %v363 = vadd.f32 %v259, %v362
        %v364 = vpop.f32.mrb[0].mxu0
        %v365 = vadd.f32 %v263, %v364
        %366 = vmatprep.mubr.f32.mxu0 0.0
        %367 = vmatmul.mubr.f32.gmra.mrb[0].mxu0 %v212
        %v368 = vpop.f32.mrb[0].mxu0
        %v369 = vadd.f32 %v259, %v368
        %v370 = vpop.f32.mrb[0].mxu0
        %v371 = vadd.f32 %v263, %v370
        %372 = vmatprep.mubr.f32.mxu0 0.0
        %373 = vmatmul.mubr.f32.gmra.mrb[0].mxu0 %v213
        %v374 = vpop.f32.mrb[0].mxu0
        %v375 = vadd.f32 %v259, %v374
        %v376 = vpop.f32.mrb[0].mxu0
        %v377 = vadd.f32 %v263, %v376
        %378 = vmatprep.mubr.f32.mxu0 0.0
        %379 = vmatmul.mubr.f32.gmra.mrb[0].mxu0 %v214
        %v380 = vpop.f32.mrb[0].mxu0
        %v381 = vadd.f32 %v259, %v380
        %v382 = vpop.f32.mrb[0].mxu0
        %v383 = vadd.f32 %v263, %v382
        %384 = vmatprep.mubr.f32.mxu0 0.0
        %385 = vmatmul.mubr.f32.gmra.mrb[0].mxu0 %v215
        %v386 = vpop.f32.mrb[0].mxu0
        %v387 = vadd.f32 %v259, %v386
        %v388 = vpop.f32.mrb[0].mxu0
        %v389 = vadd.f32 %v263, %v388
        %390 = vmatprep.mubr.f32.mxu0 0.0
        %391 = vmatmul.mubr.f32.gmra.mrb[0].mxu0 %v216
        %v392 = vpop.f32.mrb[0].mxu0
        %v393 = vadd.f32 %v259, %v392
        %v394 = vpop.f32.mrb[0].mxu0
        %v395 = vadd.f32 %v263, %v394
        %396 = vmatprep.mubr.f32.mxu0 0.0
        %397 = vmatmul.mubr.f32.gmra.mrb[0].mxu0 %v217
        %v398 = vpop.f32.mrb[0].mxu0
        %v399 = vadd.f32 %v259, %v398
        %v400 = vpop.f32.mrb[0].mxu0
        %v401 = vadd.f32 %v263, %v400
        %402 = vmatprep.mubr.f32.mxu0 0.0
        %403 = vmatmul.mubr.f32.gmra.mrb[0].mxu0 %v218
        %v404 = vpop.f32.mrb[0].mxu0
        %v405 = vadd.f32 %v259, %v404
        %v406 = vpop.f32.mrb[0].mxu0
        %v407 = vadd.f32 %v263, %v406
        %408 = vmatprep.mubr.f32.mxu0 0.0
        %409 = vmatmul.mubr.f32.gmra.mrb[0].mxu0 %v219
        %v410 = vpop.f32.mrb[0].mxu0
        %v411 = vadd.f32 %v259, %v410
        %v412 = vpop.f32.mrb[0].mxu0
        %v413 = vadd.f32 %v263, %v412
        %414 = vmatprep.mubr.f32.mxu0 0.0
        %415 = vmatmul.mubr.f32.gmra.mrb[0].mxu0 %v220
        %v416 = vpop.f32.mrb[0].mxu0
        %v417 = vadd.f32 %v259, %v416
        %v418 = vpop.f32.mrb[0].mxu0
        %v419 = vadd.f32 %v263, %v418
        %420 = vmatprep.mubr.f32.mxu0 0.0
        %421 = vmatmul.mubr.f32.gmra.mrb[0].mxu0 %v221
        %v422 = vpop.f32.mrb[0].mxu0
        %v423 = vadd.f32 %v259, %v422
        %v424 = vpop.f32.mrb[0].mxu0
        %v425 = vadd.f32 %v263, %v424
        %426 = vdwg.mxu0
        %vm427 = vcmp.ge.f32.partialorder %v333, 0.0
        %vm428 = vcmp.ge.f32.partialorder %v335, 0.0
        %vm429 = vcmp.ge.f32.partialorder %v339, 0.0
        %vm430 = vcmp.ge.f32.partialorder %v341, 0.0
        %vm431 = vcmp.ge.f32.partialorder %v345, 0.0
        %vm432 = vcmp.ge.f32.partialorder %v347, 0.0
        %vm433 = vcmp.ge.f32.partialorder %v351, 0.0
        %vm434 = vcmp.ge.f32.partialorder %v353, 0.0
        %vm435 = vcmp.ge.f32.partialorder %v357, 0.0
        %vm436 = vcmp.ge.f32.partialorder %v359, 0.0
        %vm437 = vcmp.ge.f32.partialorder %v363, 0.0
        %vm438 = vcmp.ge.f32.partialorder %v365, 0.0
        %vm439 = vcmp.ge.f32.partialorder %v369, 0.0
        %vm440 = vcmp.ge.f32.partialorder %v371, 0.0
        %vm441 = vcmp.ge.f32.partialorder %v375, 0.0
        %vm442 = vcmp.ge.f32.partialorder %v377, 0.0
        %vm443 = vcmp.ge.f32.partialorder %v381, 0.0
        %vm444 = vcmp.ge.f32.partialorder %v383, 0.0
        %vm445 = vcmp.ge.f32.partialorder %v387, 0.0
        %vm446 = vcmp.ge.f32.partialorder %v389, 0.0
        %vm447 = vcmp.ge.f32.partialorder %v393, 0.0
        %vm448 = vcmp.ge.f32.partialorder %v395, 0.0
        %vm449 = vcmp.ge.f32.partialorder %v399, 0.0
        %vm450 = vcmp.ge.f32.partialorder %v401, 0.0
        %vm451 = vcmp.ge.f32.partialorder %v405, 0.0
        %vm452 = vcmp.ge.f32.partialorder %v407, 0.0
        %vm453 = vcmp.ge.f32.partialorder %v411, 0.0
        %vm454 = vcmp.ge.f32.partialorder %v413, 0.0
        %vm455 = vcmp.ge.f32.partialorder %v417, 0.0
        %vm456 = vcmp.ge.f32.partialorder %v419, 0.0
        %vm457 = vcmp.ge.f32.partialorder %v423, 0.0
        %vm458 = vcmp.ge.f32.partialorder %v425, 0.0
        %v459 = vmul.f32 %v333, 0.2
        %v460 = vmul.f32 %v335, 0.2
        %v461 = vmul.f32 %v339, 0.2
        %v462 = vmul.f32 %v341, 0.2
        %v463 = vmul.f32 %v345, 0.2
        %v464 = vmul.f32 %v347, 0.2
        %v465 = vmul.f32 %v351, 0.2
        %v466 = vmul.f32 %v353, 0.2
        %v467 = vmul.f32 %v357, 0.2
        %v468 = vmul.f32 %v359, 0.2
        %v469 = vmul.f32 %v363, 0.2
        %v470 = vmul.f32 %v365, 0.2
        %v471 = vmul.f32 %v369, 0.2
        %v472 = vmul.f32 %v371, 0.2
        %v473 = vmul.f32 %v375, 0.2
        %v474 = vmul.f32 %v377, 0.2
        %v475 = vmul.f32 %v381, 0.2
        %v476 = vmul.f32 %v383, 0.2
        %v477 = vmul.f32 %v387, 0.2
        %v478 = vmul.f32 %v389, 0.2
        %v479 = vmul.f32 %v393, 0.2
        %v480 = vmul.f32 %v395, 0.2
        %v481 = vmul.f32 %v399, 0.2
        %v482 = vmul.f32 %v401, 0.2
        %v483 = vmul.f32 %v405, 0.2
        %v484 = vmul.f32 %v407, 0.2
        %v485 = vmul.f32 %v411, 0.2
        %v486 = vmul.f32 %v413, 0.2
        %v487 = vmul.f32 %v417, 0.2
        %v488 = vmul.f32 %v419, 0.2
        %v489 = vmul.f32 %v423, 0.2
        %v490 = vmul.f32 %v425, 0.2
        %v491 = vsel %vm427, %v333, %v459
        %v492 = vsel %vm428, %v335, %v460
        %v493 = vsel %vm429, %v339, %v461
        %v494 = vsel %vm430, %v341, %v462
        %v495 = vsel %vm431, %v345, %v463
        %v496 = vsel %vm432, %v347, %v464
        %v497 = vsel %vm433, %v351, %v465
        %v498 = vsel %vm434, %v353, %v466
        %v499 = vsel %vm435, %v357, %v467
        %v500 = vsel %vm436, %v359, %v468
        %v501 = vsel %vm437, %v363, %v469
        %v502 = vsel %vm438, %v365, %v470
        %v503 = vsel %vm439, %v369, %v471
        %v504 = vsel %vm440, %v371, %v472
        %v505 = vsel %vm441, %v375, %v473
        %v506 = vsel %vm442, %v377, %v474
        %v507 = vsel %vm443, %v381, %v475
        %v508 = vsel %vm444, %v383, %v476
        %v509 = vsel %vm445, %v387, %v477
        %v510 = vsel %vm446, %v389, %v478
        %v511 = vsel %vm447, %v393, %v479
        %v512 = vsel %vm448, %v395, %v480
        %v513 = vsel %vm449, %v399, %v481
        %v514 = vsel %vm450, %v401, %v482
        %v515 = vsel %vm451, %v405, %v483
        %v516 = vsel %vm452, %v407, %v484
        %v517 = vsel %vm453, %v411, %v485
        %v518 = vsel %vm454, %v413, %v486
        %v519 = vsel %vm455, %v417, %v487
        %v520 = vsel %vm456, %v419, %v488
        %v521 = vsel %vm457, %v423, %v489
        %v522 = vsel %vm458, %v425, %v490
        %523 = vst [vmem:[%s203] sm:$0xff] %v491
        %524 = vst [vmem:[%s203 + $0x8] sm:$0xff] %v492
        %525 = vst [vmem:[%s203 + $0x10] sm:$0xff] %v493
        %526 = vst [vmem:[%s203 + $0x18] sm:$0xff] %v494
        %527 = vst [vmem:[%s203 + $0x20] sm:$0xff] %v495
        %528 = vst [vmem:[%s203 + $0x28] sm:$0xff] %v496
        %529 = vst [vmem:[%s203 + $0x30] sm:$0xff] %v497
        %530 = vst [vmem:[%s203 + $0x38] sm:$0xff] %v498
        %531 = vst [vmem:[%s203 + $0x40] sm:$0xff] %v499
        %532 = vst [vmem:[%s203 + $0x48] sm:$0xff] %v500
        %533 = vst [vmem:[%s203 + $0x50] sm:$0xff] %v501
        %534 = vst [vmem:[%s203 + $0x58] sm:$0xff] %v502
        %535 = vst [vmem:[%s203 + $0x60] sm:$0xff] %v503
        %536 = vst [vmem:[%s203 + $0x68] sm:$0xff] %v504
        %537 = vst [vmem:[%s203 + $0x70] sm:$0xff] %v505
        %538 = vst [vmem:[%s203 + $0x78] sm:$0xff] %v506
        %539 = vst [vmem:[%s203 + $0x80] sm:$0xff] %v507
        %540 = vst [vmem:[%s203 + $0x88] sm:$0xff] %v508
        %541 = vst [vmem:[%s203 + $0x90] sm:$0xff] %v509
        %542 = vst [vmem:[%s203 + $0x98] sm:$0xff] %v510
        %543 = vst [vmem:[%s203 + $0xa0] sm:$0xff] %v511
        %544 = vst [vmem:[%s203 + $0xa8] sm:$0xff] %v512
        %545 = vst [vmem:[%s203 + $0xb0] sm:$0xff] %v513
        %546 = vst [vmem:[%s203 + $0xb8] sm:$0xff] %v514
        %547 = vst [vmem:[%s203 + $0xc0] sm:$0xff] %v515
        %548 = vst [vmem:[%s203 + $0xc8] sm:$0xff] %v516
        %549 = vst [vmem:[%s203 + $0xd0] sm:$0xff] %v517
        %550 = vst [vmem:[%s203 + $0xd8] sm:$0xff] %v518
        %551 = vst [vmem:[%s203 + $0xe0] sm:$0xff] %v519
        %552 = vst [vmem:[%s203 + $0xe8] sm:$0xff] %v520
        %553 = vst [vmem:[%s203 + $0xf0] sm:$0xff] %v521
        %554 = vst [vmem:[%s203 + $0xf8] sm:$0xff] %v522
        %s555 = sand.u32 %s97, 1
        %s556 = scalar_lea.sflag [#allocation4], %s555
        %s557 = sand.u32 %s97, 1
        %s558 = smul.addr %s557, 256
        %s559 = scalar_lea.vmem [#allocation7], %s558
        // Predicated region
        $region41: #{linear_unit.1} parent=31 // pred_check
          %p560 = pneg %p107
        $region42: #{linear_unit.1} parent=31 // pred_check_branch
          %562 = sbr.rel (%p560) target = $region44
        $region43: #{linear_unit.1} parent=31 // pred_region
          %s563 = smul.u32 16, %s21
          %s565 = ssub.s32 4096, 4096
          %566 = vsyncadd %s556, %s565
          %s567 = smul.addr %s563, 2
          %s568 = smul.addr %s567, 128
          %s569 = scalar_lea.hbm %s3, %s568
          %s570 = sshll.u32 %s559, 4
          %s571 = int_to_ptr.vmem [resolvable:$true] %s570
          %576 = dma.vmem_to_hbm [thread:$0]  %s571, 4096, %s569, %s556, 256, 256, 16
        $region44: #{linear_unit.1} parent=31 // pred_fallthru
          _
      $region32: #{linear_unit.1} parent=5 // pred_fallthru
        _
      %p577 = scmp.le.s32.totalorder 2, %s16
      // Predicated region
      $region45: #{linear_unit.1} parent=5 // pred_check
        %p578 = pneg %p577
      $region46: #{linear_unit.1} parent=5 // pred_check_branch
        %580 = sbr.rel (%p578) target = $region48
      $region47: #{linear_unit.1} parent=5 // pred_region
        %s581 = ssub.s32 %s16, 2
        // Predicated region
        $region49: #{linear_unit.1} parent=47 // pred_check
          %p582 = pneg %p113
        $region50: #{linear_unit.1} parent=47 // pred_check_branch
          %584 = sbr.rel (%p582) target = $region52
        $region51: #{linear_unit.1} parent=47 // pred_region
          %s585 = sand.u32 %s98, 1
          %s586 = scalar_lea.sflag [#allocation4], %s585
          %s587 = sand.u32 %s98, 1
          %s588 = smul.addr %s587, 256
          %s589 = scalar_lea.vmem [#allocation7], %s588
          %590 = dma.done %s586, 4096
        $region52: #{linear_unit.1} parent=47 // pred_fallthru
          _
      $region48: #{linear_unit.1} parent=5 // pred_fallthru
        _
    $region6: #{linear_unit.1} parent=1 // loop_footer
      %s20 = sadd.s32 1, %s16
    $region7: #{linear_unit.1} parent=1 // loop_footer_branch
      %15 = sbr.rel target = $region3
    $region8: #{linear_unit.1} parent=1 // loop_exit
      _
    %591 = vsyncpa [#allocation3], 1
    %s592 = scalar_lea.sflag [#allocation3], 1
    %593 = vsyncpa %s592, 1
    %594 = vsyncpa [#allocation6], 1
    %595 = vsyncpa [#allocation4], 1
    %s596 = scalar_lea.sflag [#allocation4], 1
    %597 = vsyncpa %s596, 1

</llo_original>
